<compile_context>
chip_gen: v5e
topology: v5e:2x2
jax: 0.10.0
libtpu: 0.0.40
codegen_flags: <defaults>
</compile_context>

<pallas_src>
import jax
import jax.numpy as jnp
from jax.experimental import pallas as pl
from jax.experimental.pallas import tpu as pltpu

BN_EPS = 1e-5
LANE = 128  # lane-dense padded width for the 2-class head


def _vmem_limit_bytes():
    """Per-chip scoped-VMEM limit: ~3/4 of physical, capped at 96 MiB.

    v5e/v6e: 128 MiB physical -> 96 MiB.  v7x: 64 MiB physical -> 48 MiB.
    Falls back to the conservative 32 MiB (v7x default scoped) if the query fails.
    """
    try:
        cap = int(pltpu.get_tpu_info().vmem_capacity_bytes)
        return max(32 * 1024 * 1024, min(cap * 3 // 4, 96 * 1024 * 1024))
    except Exception:
        return 32 * 1024 * 1024


# --------------------------------------------------------------------------
# Layer 1: Linear (no bias) -> BatchNorm1d (train mode) -> ReLU
# One grid step handles one output-feature tile; the whole batch is resident.
# x arrives as f32 and is cast to bf16 in-VMEM right before the MXU dot.
# --------------------------------------------------------------------------
def _layer1_kernel(x_ref, w_ref, g_ref, bt_ref, out_ref):
    x_bf = x_ref[...].astype(jnp.bfloat16)
    acc = jnp.dot(x_bf, w_ref[...], preferred_element_type=jnp.float32)

    # Single-pass biased batch statistics (per-feature, exact: full batch resident).
    mean = jnp.mean(acc, axis=0, keepdims=True)
    mean_sq = jnp.mean(acc * acc, axis=0, keepdims=True)
    var = jnp.maximum(mean_sq - mean * mean, 0.0)  # clamp: no NaN from cancellation

    scale = g_ref[...] * jax.lax.rsqrt(var + BN_EPS)
    shift = bt_ref[...] - mean * scale
    h = acc * scale + shift
    out_ref[...] = jnp.maximum(h, 0.0).astype(out_ref.dtype)


def _layer1(x_f32, w_bf16, gamma, beta, block_n, vmem_limit):
    B, K = x_f32.shape
    Kw, N = w_bf16.shape
    assert K == Kw
    block_n = min(block_n, N)
    assert N % block_n == 0, "hidden size must be a multiple of the feature tile"
    return pl.pallas_call(
        _layer1_kernel,
        out_shape=jax.ShapeDtypeStruct((B, N), jnp.bfloat16),
        grid=(N // block_n,),
        in_specs=[
            # resident f32 activations: constant block index -> single-buffered
            pl.BlockSpec((B, K), lambda j: (0, 0), pipeline_mode=pl.Buffered(1)),
            pl.BlockSpec((K, block_n), lambda j: (0, j)),  # streamed weight tile
            pl.BlockSpec((1, block_n), lambda j: (0, j)),  # gamma tile
            pl.BlockSpec((1, block_n), lambda j: (0, j)),  # beta tile
        ],
        out_specs=pl.BlockSpec((B, block_n), lambda j: (0, j)),
        compiler_params=pltpu.CompilerParams(
            dimension_semantics=("parallel",),  # feature tiles independent
            vmem_limit_bytes=vmem_limit,
        ),
    )(x_f32, w_bf16, gamma, beta)


# --------------------------------------------------------------------------
# Layer 2 + output head (fused):
#   Linear2 (no bias) -> BN2 -> ReLU -> Linear3 (lane-padded to 128) -> softmax
# Each grid step produces one h2 feature tile and accumulates its contribution
# to the (B, 128) logits scratch; the last step adds b3 and runs the softmax.
# Padded w3 columns are zero and padded b3 lanes are -1e30, so padded logits
# vanish under exp() and the 128-wide softmax equals the 2-class one.
# --------------------------------------------------------------------------
def _layer2_head_kernel(h1_ref, w2_ref, g_ref, bt_ref, w3_ref, b3_ref,
                        out_ref, acc_ref):
    j = pl.program_id(0)

    @pl.when(j == 0)
    def _init():
        acc_ref[...] = jnp.zeros_like(acc_ref)

    acc = jnp.dot(h1_ref[...], w2_ref[...], preferred_element_type=jnp.float32)
    mean = jnp.mean(acc, axis=0, keepdims=True)
    mean_sq = jnp.mean(acc * acc, axis=0, keepdims=True)
    var = jnp.maximum(mean_sq - mean * mean, 0.0)
    scale = g_ref[...] * jax.lax.rsqrt(var + BN_EPS)
    shift = bt_ref[...] - mean * scale
    h2 = jnp.maximum(acc * scale + shift, 0.0).astype(jnp.bfloat16)

    # Accumulate this feature tile's contribution to the 2-class (padded) logits.
    acc_ref[...] += jnp.dot(h2, w3_ref[...], preferred_element_type=jnp.float32)

    @pl.when(j == pl.num_programs(0) - 1)
    def _finalize():
        logits = acc_ref[...] + b3_ref[...]
        m = jnp.max(logits, axis=-1, keepdims=True)
        e = jnp.exp(logits - m)
        denom = jnp.sum(e, axis=-1, keepdims=True)
        out_ref[...] = e * pl.reciprocal(denom, approx=True)


def _layer2_head(h1_bf16, w2_bf16, gamma, beta, w3_pad, b3_pad, block_n, vmem_limit):
    B, K = h1_bf16.shape
    Kw, N = w2_bf16.shape
    assert K == Kw
    block_n = min(block_n, N)
    assert N % block_n == 0, "hidden size must be a multiple of the feature tile"
    return pl.pallas_call(
        _layer2_head_kernel,
        out_shape=jax.ShapeDtypeStruct((B, LANE), jnp.float32),
        grid=(N // block_n,),
        in_specs=[
            pl.BlockSpec((B, K), lambda j: (0, 0), pipeline_mode=pl.Buffered(1)),
            pl.BlockSpec((K, block_n), lambda j: (0, j)),   # w2 tile
            pl.BlockSpec((1, block_n), lambda j: (0, j)),   # gamma tile
            pl.BlockSpec((1, block_n), lambda j: (0, j)),   # beta tile
            pl.BlockSpec((block_n, LANE), lambda j: (j, 0)),  # padded w3 tile
            pl.BlockSpec((1, LANE), lambda j: (0, 0), pipeline_mode=pl.Buffered(1)),
        ],
        out_specs=pl.BlockSpec((B, LANE), lambda j: (0, 0)),  # written on last step
        scratch_shapes=[pltpu.VMEM((B, LANE), jnp.float32)],  # logits accumulator
        compiler_params=pltpu.CompilerParams(
            # feature axis is a reduction for the fused logits accumulator
            dimension_semantics=("arbitrary",),
            vmem_limit_bytes=vmem_limit,
        ),
    )(h1_bf16, w2_bf16, gamma, beta, w3_pad, b3_pad)


def discriminator_forward(x, alpha, params, *, block_n=256):
    """x: (B, in_size) f32; alpha unused in forward (gradient-reversal scale only).

    block_n: output-feature tile width.  256 is MXU-native on v6e/v7x; 128 is the
    minimum on all chips; 512 is worth it on v5e/v6e when VMEM allows.
    """
    del alpha  # ReverseLayerF is the identity in the forward pass.
    vmem_limit = _vmem_limit_bytes()
    # b1/b2 omitted: training-mode BN mean subtraction cancels the Linear bias exactly.
    h1 = _layer1(x, params["w1"], params["g1"], params["bt1"], block_n, vmem_limit)
    probs_pad = _layer2_head(h1, params["w2"], params["g2"], params["bt2"],
                             params["w3p"], params["b3p"], block_n, vmem_limit)
    return probs_pad[:, :2]


def init_params(key, in_size, h):
    """nn.Linear-style init: U(-1/sqrt(fan_in), +1/sqrt(fan_in)); weights stored bf16.

    Also pre-builds the lane-padded head weights (w3p: zero-padded, b3p: -1e30-padded)
    once, so no per-forward padding ops are emitted.
    """
    ks = jax.random.split(key, 6)

    def lin(kw, kb, fan_in, fan_out):
        bound = 1.0 / (fan_in ** 0.5)
        w = jax.random.uniform(kw, (fan_in, fan_out), jnp.float32, -bound, bound)
        b = jax.random.uniform(kb, (1, fan_out), jnp.float32, -bound, bound)
        return w, b

    w1, b1 = lin(ks[0], ks[1], in_size, h)
    w2, b2 = lin(ks[2], ks[3], h, h)
    w3, b3 = lin(ks[4], ks[5], h, 2)

    w3_bf = w3.astype(jnp.bfloat16)
    w3p = jnp.zeros((h, LANE), jnp.bfloat16).at[:, :2].set(w3_bf)
    b3p = jnp.full((1, LANE), -1e30, jnp.float32).at[:, :2].set(b3)

    return dict(
        # matmul operands stored in bf16 (MXU-native; f32 accumulation in-kernel)
        w1=w1.astype(jnp.bfloat16), b1=b1,
        g1=jnp.ones((1, h), jnp.float32), bt1=jnp.zeros((1, h), jnp.float32),
        w2=w2.astype(jnp.bfloat16), b2=b2,
        g2=jnp.ones((1, h), jnp.float32), bt2=jnp.zeros((1, h), jnp.float32),
        w3=w3.astype(jnp.bfloat16), b3=b3,
        w3p=w3p, b3p=b3p,   # pre-padded head params used by the fused kernel
    )


if __name__ == "__main__":
    # Small shapes consistent with the module (in_size=2048, h=2048 scaled down).
    # block_n=128 over H=256 -> a 2-step grid that exercises weight streaming and
    # the fused-head accumulator init/finalize paths.
    B, IN_SIZE, H = 8, 256, 256

    key = jax.random.PRNGKey(0)
    k_x, k_p = jax.random.split(key)
    x = jax.random.normal(k_x, (B, IN_SIZE), jnp.float32)
    alpha = 1.0  # unused in forward (gradient reversal only scales the backward pass)
    params = init_params(k_p, IN_SIZE, H)

    probs = jax.block_until_ready(discriminator_forward(x, alpha, params, block_n=128))

    # Sanity checks: shape, rows sum to ~1, matches pure-JAX reference.
    assert probs.shape == (B, 2)
    assert jnp.allclose(jnp.sum(probs, axis=-1), 1.0, atol=5e-3)

    def ref(x, p):
        # Faithful PyTorch semantics incl. b1/b2 (which BN cancels) in full f32.
        def bn(v, g, bt):
            mu = v.mean(0, keepdims=True)
            var = ((v - mu) ** 2).mean(0, keepdims=True)
            return (v - mu) * jax.lax.rsqrt(var + BN_EPS) * g + bt

        w1 = p["w1"].astype(jnp.float32)
        w2 = p["w2"].astype(jnp.float32)
        w3 = p["w3"].astype(jnp.float32)
        h1 = jnp.maximum(bn(x @ w1 + p["b1"], p["g1"], p["bt1"]), 0.0)
        h2 = jnp.maximum(bn(h1 @ w2 + p["b2"], p["g2"], p["bt2"]), 0.0)
        logits = h2 @ w3 + p["b3"]
        return jax.nn.softmax(logits, axis=-1)

    # bf16 matmul operands -> looser tolerance than the pure-f32 version.
    assert jnp.allclose(probs, ref(x, params), atol=3e-2), "mismatch vs reference"
    print("KERNEL_OK")
</pallas_src>

<mosaic_0001>
module attributes {stable_mosaic.version = 11 : i64} {
  func.func @_layer1_kernel(%arg0: i32, %arg1: memref<8x256xf32, #tpu.memory_space<vmem>>, %arg2: memref<256x128xbf16, #tpu.memory_space<vmem>>, %arg3: memref<1x128xf32, #tpu.memory_space<vmem>>, %arg4: memref<1x128xf32, #tpu.memory_space<vmem>>, %arg5: memref<8x128xbf16, #tpu.memory_space<vmem>>) attributes {dimension_semantics = [#tpu.dimension_semantics<parallel>], iteration_bounds = array<i64: 2>, scalar_prefetch = 0 : i64, scratch_operands = 0 : i64, tpu.core_type = #tpu.core_type<tc>, window_params = [{pipeline_mode = #tpu.pipeline_mode<synchronous>, transform_indices = @transform_0, window_bounds = array<i64: 8, 256>}, {transform_indices = @transform_1, window_bounds = array<i64: 256, 128>}, {transform_indices = @transform_2, window_bounds = array<i64: 1, 128>}, {transform_indices = @transform_3, window_bounds = array<i64: 1, 128>}, {transform_indices = @transform_4, window_bounds = array<i64: 8, 128>}]} {
    %c0 = arith.constant 0 : index
    %c0_0 = arith.constant 0 : index
    %0 = vector.load %arg1[%c0, %c0_0] : memref<8x256xf32, #tpu.memory_space<vmem>>, vector<8x256xf32>
    %1 = arith.truncf %0 : vector<8x256xf32> to vector<8x256xbf16>
    %c0_1 = arith.constant 0 : index
    %c0_2 = arith.constant 0 : index
    %2 = vector.load %arg2[%c0_1, %c0_2] : memref<256x128xbf16, #tpu.memory_space<vmem>>, vector<256x128xbf16>
    %cst = arith.constant dense<0.000000e+00> : vector<8x128xf32>
    %3 = tpu.matmul %1, %2, %cst {dimension_numbers = #tpu.dot_dimension_numbers<[1], [0], [0], [1], [0, 0, 1, 1], [], []>} : vector<8x256xbf16>, vector<256x128xbf16>, vector<8x128xf32> -> vector<8x128xf32>
    %cst_3 = arith.constant dense<0.000000e+00> : vector<128xf32>
    %4 = vector.multi_reduction <add>, %3, %cst_3 [0] : vector<8x128xf32> to vector<128xf32>
    %5 = vector.shape_cast %4 : vector<128xf32> to vector<1x128xf32>
    %cst_4 = arith.constant 8.000000e+00 : f32
    %6 = vector.broadcast %cst_4 : f32 to vector<1x128xf32>
    %7 = arith.divf %5, %6 : vector<1x128xf32>
    %8 = arith.mulf %3, %3 : vector<8x128xf32>
    %cst_5 = arith.constant dense<0.000000e+00> : vector<128xf32>
    %9 = vector.multi_reduction <add>, %8, %cst_5 [0] : vector<8x128xf32> to vector<128xf32>
    %10 = vector.shape_cast %9 : vector<128xf32> to vector<1x128xf32>
    %cst_6 = arith.constant 8.000000e+00 : f32
    %11 = vector.broadcast %cst_6 : f32 to vector<1x128xf32>
    %12 = arith.divf %10, %11 : vector<1x128xf32>
    %13 = arith.mulf %7, %7 : vector<1x128xf32>
    %14 = arith.subf %12, %13 : vector<1x128xf32>
    %cst_7 = arith.constant 0.000000e+00 : f32
    %15 = vector.broadcast %cst_7 : f32 to vector<1x128xf32>
    %16 = arith.maximumf %14, %15 : vector<1x128xf32>
    %c0_8 = arith.constant 0 : index
    %c0_9 = arith.constant 0 : index
    %17 = vector.load %arg3[%c0_8, %c0_9] : memref<1x128xf32, #tpu.memory_space<vmem>>, vector<1x128xf32>
    %cst_10 = arith.constant 9.99999974E-6 : f32
    %18 = vector.broadcast %cst_10 : f32 to vector<1x128xf32>
    %19 = arith.addf %16, %18 : vector<1x128xf32>
    %20 = math.rsqrt %19 : vector<1x128xf32>
    %21 = arith.mulf %17, %20 : vector<1x128xf32>
    %c0_11 = arith.constant 0 : index
    %c0_12 = arith.constant 0 : index
    %22 = vector.load %arg4[%c0_11, %c0_12] : memref<1x128xf32, #tpu.memory_space<vmem>>, vector<1x128xf32>
    %23 = arith.mulf %7, %21 : vector<1x128xf32>
    %24 = arith.subf %22, %23 : vector<1x128xf32>
    %25 = vector.broadcast %21 : vector<1x128xf32> to vector<8x128xf32>
    %26 = arith.mulf %3, %25 : vector<8x128xf32>
    %27 = vector.broadcast %24 : vector<1x128xf32> to vector<8x128xf32>
    %28 = arith.addf %26, %27 : vector<8x128xf32>
    %cst_13 = arith.constant 0.000000e+00 : f32
    %29 = vector.broadcast %cst_13 : f32 to vector<8x128xf32>
    %30 = arith.maximumf %28, %29 : vector<8x128xf32>
    %31 = arith.truncf %30 : vector<8x128xf32> to vector<8x128xbf16>
    %c0_14 = arith.constant 0 : index
    %c0_15 = arith.constant 0 : index
    %32 = vector.load %arg5[%c0_14, %c0_15] : memref<8x128xbf16, #tpu.memory_space<vmem>>, vector<8x128xbf16>
    tpu.vector_store %arg5[%c0_14, %c0_15], %31 {strides = array<i32>} : memref<8x128xbf16, #tpu.memory_space<vmem>>, vector<8x128xbf16>,
    return
  }
  func.func @transform_0(%arg0: i32) -> (i32, i32) {
    %c0_i32 = arith.constant 0 : i32
    %c0_i32_0 = arith.constant 0 : i32
    %c0_i32_1 = arith.constant 0 : i32
    return %c0_i32, %c0_i32_0 : i32, i32
  }
  func.func @transform_1(%arg0: i32) -> (i32, i32) {
    %c0_i32 = arith.constant 0 : i32
    %c0_i32_0 = arith.constant 0 : i32
    return %c0_i32, %arg0 : i32, i32
  }
  func.func @transform_2(%arg0: i32) -> (i32, i32) {
    %c0_i32 = arith.constant 0 : i32
    %c0_i32_0 = arith.constant 0 : i32
    return %c0_i32, %arg0 : i32, i32
  }
  func.func @transform_3(%arg0: i32) -> (i32, i32) {
    %c0_i32 = arith.constant 0 : i32
    %c0_i32_0 = arith.constant 0 : i32
    return %c0_i32, %arg0 : i32, i32
  }
  func.func @transform_4(%arg0: i32) -> (i32, i32) {
    %c0_i32 = arith.constant 0 : i32
    %c0_i32_0 = arith.constant 0 : i32
    return %c0_i32, %arg0 : i32, i32
  }
}

</mosaic_0001>

<llo_original>
// kernel: tpu_custom_call.1
$region0: #{tpu_custom_call.1}
  #allocation0 [shape = 'u32[]', space=smem, size = 0x4, offset = 0x4, fixed_abs, tag = 'smem constant byte address 0x4 - core index']
  #allocation1 [shape = 'u32[72,128]{1,0:T(1,128)}', space=vmem, size = 0x9000, scoped, tag = 'internal scratch']
  %s0 = inlined_call_operand.hbm [shape: f32[8,256], index: 0, kind: input, shape index: {}]
  %s1 = inlined_call_operand.hbm [shape: bf16[256,256], index: 1, kind: input, shape index: {}]
  %s2 = inlined_call_operand.hbm [shape: f32[1,256], index: 2, kind: input, shape index: {}]
  %s3 = inlined_call_operand.vmem [shape: f32[1,256], index: 3, kind: input, shape index: {}]
  %s4 = inlined_call_operand.hbm [shape: bf16[8,256], index: 4, kind: output, shape index: {}]
  %s5 = sld [smem:[#allocation0]]
  $region61: #{tpu_custom_call.1} parent=0
    _
  %s7 = ssub.s32 1, %s5
  %s8 = scalar_select 0, %s7, %s5
  $region1: #{tpu_custom_call.1} parent=0
    #allocation2 [shape = 'u8[8192]{0}', space=vmem, size = 0x2000, scoped, tag = 'input window, operand 0, single buffered']
    #allocation3 [shape = 's32[2]{0}', space=sflag, size = 0x8, scoped, tag = 'scoped memory for tpu_custom_call.1']
    #allocation4 [shape = 's32[2]{0}', space=sflag, size = 0x8, scoped, tag = 'scoped memory for tpu_custom_call.1']
    #allocation5 [shape = 'u8[131072]{0}', space=vmem, size = 0x20000, scoped, tag = 'input window, operand 1']
    #allocation6 [shape = 's32[2]{0}', space=sflag, size = 0x8, scoped, tag = 'scoped memory for tpu_custom_call.1']
    #allocation7 [shape = 'u8[1024]{0}', space=vmem, size = 0x400, scoped, tag = 'input window, operand 2']
    #allocation8 [shape = 'u8[4096]{0}', space=vmem, size = 0x1000, scoped, tag = 'output window, operand 0']
    %9 = vsyncpa [#allocation3], 0
    %10 = vsyncpa [#allocation6], 0
    %s11 = scalar_lea.sflag [#allocation6], 1
    %12 = vsyncpa %s11, 0
    %13 = vsyncpa [#allocation4], 0
    %s14 = scalar_lea.sflag [#allocation4], 1
    %15 = vsyncpa %s14, 0
    loop: start=0, step=1, limit=4
    $region2: #{tpu_custom_call.1} parent=1 // loop_pre_header
      _
    $region3: #{tpu_custom_call.1} parent=1 // loop_header
      %s17 = sphi 0, %s21
      %p18 = scmp.ge.s32.totalorder %s17, 4
      %s25 = sphi 0, %s25
      %s27 = sphi 0, %s25
      %s28 = sphi 0, %s27
      %s42 = sphi 0, %s28
      %s48 = sphi 0, %s50
      %s51 = sphi 0, %s48
      %s52 = sphi 0, %s51
      %s68 = sphi 0, %s52
      %s74 = sphi 0, %s76
      %s77 = sphi 0, %s74
      %s78 = sphi 0, %s77
      %s94 = sphi 0, %s78
      %s100 = sphi 0, %s102
      %s103 = sphi 0, %s100
      %s104 = sphi 0, %s103
      %s120 = sphi 0, %s104
      %s126 = sphi 0, %s128
      %s129 = sphi 0, %s126
      %s130 = sphi 0, %s129
      %s146 = sphi 0, %s130
    $region4: #{tpu_custom_call.1} parent=1 // loop_header_branch
      %20 = sbr.rel (%p18) target = $region8
    $region5: #{tpu_custom_call.1} parent=1 // loop_body
      %s22 = ssub.s32 %s17, 1
      %s23 = ssub.s32 %s17, 2
      %s24 = sadd.s32 %s17, 1
      %s26 = sadd.s32 %s25, 1
      %p29 = scmp.eq.s32.totalorder %s17, 1
      %p30 = scmp.ne.s32.totalorder %s25, %s27
      %p31 = scmp.eq.s32.totalorder %s17, 0
      %p32 = por %p30, %p31
      %p33 = scmp.ne.s32.totalorder %s25, %s27
      %p34 = scmp.eq.s32.totalorder %s22, 1
      %p35 = por %p33, %p34
      %p36 = scmp.ne.s32.totalorder %s27, %s28
      %p37 = scmp.eq.s32.totalorder %s22, 0
      %p38 = por %p36, %p37
      %p39 = scmp.ne.s32.totalorder %s27, %s28
      %p40 = scmp.eq.s32.totalorder %s23, 1
      %p41 = por %p39, %p40
      %p43 = scmp.ne.s32.totalorder %s28, %s42
      %p44 = scmp.eq.s32.totalorder %s23, 0
      %p45 = por %p43, %p44
      %s46 = ssub.s32 %s17, %s24
      %p47 = scmp.eq.s32.totalorder %s46, 0
      %s49 = sadd.s32 %s48, 1
      %s50 = scalar_select %p47, %s48, %s49
      %p53 = pneg %p47
      %p54 = scmp.eq.s32.totalorder %s17, 1
      %p55 = por %p53, %p54
      %p56 = scmp.ne.s32.totalorder %s48, %s51
      %p57 = scmp.eq.s32.totalorder %s17, 0
      %p58 = por %p56, %p57
      %p59 = scmp.ne.s32.totalorder %s48, %s51
      %p60 = scmp.eq.s32.totalorder %s22, 1
      %p61 = por %p59, %p60
      %p62 = scmp.ne.s32.totalorder %s51, %s52
      %p63 = scmp.eq.s32.totalorder %s22, 0
      %p64 = por %p62, %p63
      %p65 = scmp.ne.s32.totalorder %s51, %s52
      %p66 = scmp.eq.s32.totalorder %s23, 1
      %p67 = por %p65, %p66
      %p69 = scmp.ne.s32.totalorder %s52, %s68
      %p70 = scmp.eq.s32.totalorder %s23, 0
      %p71 = por %p69, %p70
      %s72 = ssub.s32 %s17, %s24
      %p73 = scmp.eq.s32.totalorder %s72, 0
      %s75 = sadd.s32 %s74, 1
      %s76 = scalar_select %p73, %s74, %s75
      %p79 = pneg %p73
      %p80 = scmp.eq.s32.totalorder %s17, 1
      %p81 = por %p79, %p80
      %p82 = scmp.ne.s32.totalorder %s74, %s77
      %p83 = scmp.eq.s32.totalorder %s17, 0
      %p84 = por %p82, %p83
      %p85 = scmp.ne.s32.totalorder %s74, %s77
      %p86 = scmp.eq.s32.totalorder %s22, 1
      %p87 = por %p85, %p86
      %p88 = scmp.ne.s32.totalorder %s77, %s78
      %p89 = scmp.eq.s32.totalorder %s22, 0
      %p90 = por %p88, %p89
      %p91 = scmp.ne.s32.totalorder %s77, %s78
      %p92 = scmp.eq.s32.totalorder %s23, 1
      %p93 = por %p91, %p92
      %p95 = scmp.ne.s32.totalorder %s78, %s94
      %p96 = scmp.eq.s32.totalorder %s23, 0
      %p97 = por %p95, %p96
      %s98 = ssub.s32 %s17, %s24
      %p99 = scmp.eq.s32.totalorder %s98, 0
      %s101 = sadd.s32 %s100, 1
      %s102 = scalar_select %p99, %s100, %s101
      %p105 = pneg %p99
      %p106 = scmp.eq.s32.totalorder %s17, 1
      %p107 = por %p105, %p106
      %p108 = scmp.ne.s32.totalorder %s100, %s103
      %p109 = scmp.eq.s32.totalorder %s17, 0
      %p110 = por %p108, %p109
      %p111 = scmp.ne.s32.totalorder %s100, %s103
      %p112 = scmp.eq.s32.totalorder %s22, 1
      %p113 = por %p111, %p112
      %p114 = scmp.ne.s32.totalorder %s103, %s104
      %p115 = scmp.eq.s32.totalorder %s22, 0
      %p116 = por %p114, %p115
      %p117 = scmp.ne.s32.totalorder %s103, %s104
      %p118 = scmp.eq.s32.totalorder %s23, 1
      %p119 = por %p117, %p118
      %p121 = scmp.ne.s32.totalorder %s104, %s120
      %p122 = scmp.eq.s32.totalorder %s23, 0
      %p123 = por %p121, %p122
      %s124 = ssub.s32 %s17, %s24
      %p125 = scmp.eq.s32.totalorder %s124, 0
      %s127 = sadd.s32 %s126, 1
      %s128 = scalar_select %p125, %s126, %s127
      %p131 = pneg %p125
      %p132 = scmp.eq.s32.totalorder %s17, 1
      %p133 = por %p131, %p132
      %p134 = scmp.ne.s32.totalorder %s126, %s129
      %p135 = scmp.eq.s32.totalorder %s17, 0
      %p136 = por %p134, %p135
      %p137 = scmp.ne.s32.totalorder %s126, %s129
      %p138 = scmp.eq.s32.totalorder %s22, 1
      %p139 = por %p137, %p138
      %p140 = scmp.ne.s32.totalorder %s129, %s130
      %p141 = scmp.eq.s32.totalorder %s22, 0
      %p142 = por %p140, %p141
      %p143 = scmp.ne.s32.totalorder %s129, %s130
      %p144 = scmp.eq.s32.totalorder %s23, 1
      %p145 = por %p143, %p144
      %p147 = scmp.ne.s32.totalorder %s130, %s146
      %p148 = scmp.eq.s32.totalorder %s23, 0
      %p149 = por %p147, %p148
      %p150 = scmp.le.s32.totalorder 1, %s17
      %p151 = scmp.lt.s32.totalorder %s17, 3
      %p152 = pnand %p150, %p151
      %p153 = pneg %p152
      // Predicated region
      $region9: #{tpu_custom_call.1} parent=5 // pred_check
        _
      $region10: #{tpu_custom_call.1} parent=5 // pred_check_branch
        %155 = sbr.rel (%p152) target = $region12
      $region11: #{tpu_custom_call.1} parent=5 // pred_region
        %s156 = ssub.s32 %s17, 1
        // Predicated region
        $region13: #{tpu_custom_call.1} parent=11 // pred_check
          %p157 = pneg %p38
        $region14: #{tpu_custom_call.1} parent=11 // pred_check_branch
          %159 = sbr.rel (%p157) target = $region16
        $region15: #{tpu_custom_call.1} parent=11 // pred_region
          %161 = vsyncadd [#allocation3], 0
          %s163 = sshll.u32 %s0, 4
          %s164 = int_to_ptr.hbm [resolvable:$true] %s163
          %s165 = sshll.u32 [#allocation2], 4
          %s166 = int_to_ptr.vmem [resolvable:$true] %s165
          %168 = dma.hbm_to_vmem [thread:$0]  %s164, 256, %s166, [#allocation3]
        $region16: #{tpu_custom_call.1} parent=11 // pred_fallthru
          _
      $region12: #{tpu_custom_call.1} parent=5 // pred_fallthru
        _
      %p169 = scmp.lt.s32.totalorder %s17, 2
      // Predicated region
      $region17: #{tpu_custom_call.1} parent=5 // pred_check
        %p170 = pneg %p169
      $region18: #{tpu_custom_call.1} parent=5 // pred_check_branch
        %172 = sbr.rel (%p170) target = $region20
      $region19: #{tpu_custom_call.1} parent=5 // pred_region
        // Predicated region
        $region21: #{tpu_custom_call.1} parent=19 // pred_check
          %p173 = pneg %p58
        $region22: #{tpu_custom_call.1} parent=19 // pred_check_branch
          %175 = sbr.rel (%p173) target = $region24
        $region23: #{tpu_custom_call.1} parent=19 // pred_region
          %s176 = sand.u32 %s17, 1
          %s177 = scalar_lea.sflag [#allocation6], %s176
          %s178 = sand.u32 %s48, 1
          %s179 = smul.addr %s178, 128
          %s180 = scalar_lea.vmem [#allocation5], %s179
          %182 = vsyncadd %s177, 0
          %s183 = smul.addr %s17, 4
          %s184 = scalar_lea.hbm %s1, %s183
          %s185 = sshll.u32 %s184, 4
          %s186 = int_to_ptr.hbm [resolvable:$true] %s185
          %s187 = sshll.u32 %s180, 4
          %s188 = int_to_ptr.vmem [resolvable:$true] %s187
          %193 = dma.hbm_to_vmem [thread:$0]  %s186, 2048, %s188, %s177, 128, 64, 4
        $region24: #{tpu_custom_call.1} parent=19 // pred_fallthru
          _
        // Predicated region
        $region25: #{tpu_custom_call.1} parent=19 // pred_check
          %p194 = pneg %p84
        $region26: #{tpu_custom_call.1} parent=19 // pred_check_branch
          %196 = sbr.rel (%p194) target = $region28
        $region27: #{tpu_custom_call.1} parent=19 // pred_region
          %s197 = sand.u32 %s17, 1
          %s198 = scalar_lea.sflag [#allocation6], %s197
          %s199 = sand.u32 %s74, 1
          %s200 = scalar_lea.vmem [#allocation7], %s199
          %202 = vsyncadd %s198, 0
          %s203 = scalar_lea.hbm %s2, %s17
          %s205 = sshll.u32 %s203, 4
          %s206 = int_to_ptr.hbm [resolvable:$true] %s205
          %s207 = sshll.u32 %s200, 4
          %s208 = int_to_ptr.vmem [resolvable:$true] %s207
          %210 = dma.hbm_to_vmem [thread:$0]  %s206, 16, %s208, %s198
        $region28: #{tpu_custom_call.1} parent=19 // pred_fallthru
          _
        // Predicated region
        $region29: #{tpu_custom_call.1} parent=19 // pred_check
          %p211 = pneg %p110
        $region30: #{tpu_custom_call.1} parent=19 // pred_check_branch
          %213 = sbr.rel (%p211) target = $region32
        $region31: #{tpu_custom_call.1} parent=19 // pred_region
          %p214 = scmp.lt.s32.totalorder %s17, 1
          %s215 = scalar_select %p214, %s17, 1
          %s216 = scalar_lea.vmem %s3, %s215
        $region32: #{tpu_custom_call.1} parent=19 // pred_fallthru
          _
      $region20: #{tpu_custom_call.1} parent=5 // pred_fallthru
        _
      %p217 = scmp.le.s32.totalorder 1, %s17
      %p218 = scmp.lt.s32.totalorder %s17, 3
      %p219 = pnand %p217, %p218
      %p220 = pneg %p219
      // Predicated region
      $region33: #{tpu_custom_call.1} parent=5 // pred_check
        _
      $region34: #{tpu_custom_call.1} parent=5 // pred_check_branch
        %222 = sbr.rel (%p219) target = $region36
      $region35: #{tpu_custom_call.1} parent=5 // pred_region
        %s223 = ssub.s32 %s17, 1
        // Predicated region
        $region37: #{tpu_custom_call.1} parent=35 // pred_check
          %p224 = pneg %p38
        $region38: #{tpu_custom_call.1} parent=35 // pred_check_branch
          %226 = sbr.rel (%p224) target = $region40
        $region39: #{tpu_custom_call.1} parent=35 // pred_region
          %228 = dma.done [#allocation3], 256
        $region40: #{tpu_custom_call.1} parent=35 // pred_fallthru
          _
        %s229 = sand.u32 %s22, 1
        %s230 = scalar_lea.sflag [#allocation6], %s229
        %s231 = sand.u32 %s51, 1
        %s232 = smul.addr %s231, 128
        %s233 = scalar_lea.vmem [#allocation5], %s232
        // Predicated region
        $region41: #{tpu_custom_call.1} parent=35 // pred_check
          %p234 = pneg %p64
        $region42: #{tpu_custom_call.1} parent=35 // pred_check_branch
          %236 = sbr.rel (%p234) target = $region44
        $region43: #{tpu_custom_call.1} parent=35 // pred_region
          %238 = dma.done %s230, 2048
        $region44: #{tpu_custom_call.1} parent=35 // pred_fallthru
          _
        %s239 = sand.u32 %s22, 1
        %s240 = scalar_lea.sflag [#allocation6], %s239
        %s241 = sand.u32 %s77, 1
        %s242 = scalar_lea.vmem [#allocation7], %s241
        // Predicated region
        $region45: #{tpu_custom_call.1} parent=35 // pred_check
          %p243 = pneg %p90
        $region46: #{tpu_custom_call.1} parent=35 // pred_check_branch
          %245 = sbr.rel (%p243) target = $region48
        $region47: #{tpu_custom_call.1} parent=35 // pred_region
          %247 = dma.done %s240, 16
        $region48: #{tpu_custom_call.1} parent=35 // pred_fallthru
          _
        %p248 = pneg %p38
        %p249 = pneg %p35
        %s250 = sand.u32 %s22, 1
        %s251 = scalar_lea.sflag [#allocation6], %s250
        %s252 = sand.u32 %s51, 1
        %s253 = smul.addr %s252, 128
        %s254 = scalar_lea.vmem [#allocation5], %s253
        %p255 = pneg %p64
        %p256 = pneg %p61
        %s257 = sand.u32 %s22, 1
        %s258 = scalar_lea.sflag [#allocation6], %s257
        %s259 = sand.u32 %s77, 1
        %s260 = scalar_lea.vmem [#allocation7], %s259
        %p261 = pneg %p90
        %p262 = pneg %p87
        %p263 = scmp.lt.s32.totalorder %s22, 1
        %s264 = scalar_select %p263, %s22, 1
        %s265 = scalar_lea.vmem %s3, %s264
        %p266 = pneg %p116
        %p267 = pneg %p113
        %p268 = pneg %p142
        %p269 = pneg %p139
        %s270 = sand.u32 %s129, 1
        %s271 = scalar_lea.sflag [#allocation4], %s270
        %s272 = sand.u32 %s129, 1
        %s273 = smul.addr %s272, 4
        %s274 = scalar_lea.vmem [#allocation8], %s273
        %p275 = scmp.lt.s32.totalorder %s22, 1
        %s276 = scalar_select %p275, %s22, 1
        %s277 = scalar_lea.vmem %s3, %s276
        %v278 = vld [vmem:[#allocation2] sm:$0xff]
        %v279 = vld [vmem:[#allocation2 + $0x8] sm:$0xff]
        %v280 = vpack.c.bf16 %v278, %v278
        %v281 = vpack.c.bf16 %v279, %v279
        %v282 = vld [vmem:[%s233] sm:$0xf]
        %v283 = vld [vmem:[%s233 + $0x4] sm:$0xf]
        %v284 = vld [vmem:[%s233 + $0x8] sm:$0xf]
        %v285 = vld [vmem:[%s233 + $0xc] sm:$0xf]
        %v286 = vld [vmem:[%s233 + $0x10] sm:$0xf]
        %v287 = vld [vmem:[%s233 + $0x14] sm:$0xf]
        %v288 = vld [vmem:[%s233 + $0x18] sm:$0xf]
        %v289 = vld [vmem:[%s233 + $0x1c] sm:$0xf]
        %v290 = vld [vmem:[%s233 + $0x20] sm:$0xf]
        %v291 = vld [vmem:[%s233 + $0x24] sm:$0xf]
        %v292 = vld [vmem:[%s233 + $0x28] sm:$0xf]
        %v293 = vld [vmem:[%s233 + $0x2c] sm:$0xf]
        %v294 = vld [vmem:[%s233 + $0x30] sm:$0xf]
        %v295 = vld [vmem:[%s233 + $0x34] sm:$0xf]
        %v296 = vld [vmem:[%s233 + $0x38] sm:$0xf]
        %v297 = vld [vmem:[%s233 + $0x3c] sm:$0xf]
        %v298 = vld [vmem:[%s233 + $0x40] sm:$0xf]
        %v299 = vld [vmem:[%s233 + $0x44] sm:$0xf]
        %v300 = vld [vmem:[%s233 + $0x48] sm:$0xf]
        %v301 = vld [vmem:[%s233 + $0x4c] sm:$0xf]
        %v302 = vld [vmem:[%s233 + $0x50] sm:$0xf]
        %v303 = vld [vmem:[%s233 + $0x54] sm:$0xf]
        %v304 = vld [vmem:[%s233 + $0x58] sm:$0xf]
        %v305 = vld [vmem:[%s233 + $0x5c] sm:$0xf]
        %v306 = vld [vmem:[%s233 + $0x60] sm:$0xf]
        %v307 = vld [vmem:[%s233 + $0x64] sm:$0xf]
        %v308 = vld [vmem:[%s233 + $0x68] sm:$0xf]
        %v309 = vld [vmem:[%s233 + $0x6c] sm:$0xf]
        %v310 = vld [vmem:[%s233 + $0x70] sm:$0xf]
        %v311 = vld [vmem:[%s233 + $0x74] sm:$0xf]
        %v312 = vld [vmem:[%s233 + $0x78] sm:$0xf]
        %v313 = vld [vmem:[%s233 + $0x7c] sm:$0xf]
        %v346 = vunpack.c.l.b16 %v282
        %v347 = vunpack.c.l.b16 %v283
        %v348 = vunpack.c.l.b16 %v284
        %v349 = vunpack.c.l.b16 %v285
        %v350 = vunpack.c.l.b16 %v286
        %v351 = vunpack.c.l.b16 %v287
        %v352 = vunpack.c.l.b16 %v288
        %v353 = vunpack.c.l.b16 %v289
        %v354 = vunpack.c.l.b16 %v290
        %v355 = vunpack.c.l.b16 %v291
        %v356 = vunpack.c.l.b16 %v292
        %v357 = vunpack.c.l.b16 %v293
        %v358 = vunpack.c.l.b16 %v294
        %v359 = vunpack.c.l.b16 %v295
        %v360 = vunpack.c.l.b16 %v296
        %v361 = vunpack.c.l.b16 %v297
        %v362 = vunpack.c.l.b16 %v298
        %v363 = vunpack.c.l.b16 %v299
        %v364 = vunpack.c.l.b16 %v300
        %v365 = vunpack.c.l.b16 %v301
        %v366 = vunpack.c.l.b16 %v302
        %v367 = vunpack.c.l.b16 %v303
        %v368 = vunpack.c.l.b16 %v304
        %v369 = vunpack.c.l.b16 %v305
        %v370 = vunpack.c.l.b16 %v306
        %v371 = vunpack.c.l.b16 %v307
        %v372 = vunpack.c.l.b16 %v308
        %v373 = vunpack.c.l.b16 %v309
        %v374 = vunpack.c.l.b16 %v310
        %v375 = vunpack.c.l.b16 %v311
        %v376 = vunpack.c.l.b16 %v312
        %v377 = vunpack.c.l.b16 %v313
        %v378 = vpack.c.b16 %v347, %v346
        %v379 = vpack.c.b16 %v349, %v348
        %v380 = vpack.c.b16 %v351, %v350
        %v381 = vpack.c.b16 %v353, %v352
        %v382 = vpack.c.b16 %v355, %v354
        %v383 = vpack.c.b16 %v357, %v356
        %v384 = vpack.c.b16 %v359, %v358
        %v385 = vpack.c.b16 %v361, %v360
        %v386 = vpack.c.b16 %v363, %v362
        %v387 = vpack.c.b16 %v365, %v364
        %v388 = vpack.c.b16 %v367, %v366
        %v389 = vpack.c.b16 %v369, %v368
        %v390 = vpack.c.b16 %v371, %v370
        %v391 = vpack.c.b16 %v373, %v372
        %v392 = vpack.c.b16 %v375, %v374
        %v393 = vpack.c.b16 %v377, %v376
        %410 = vmatpush.bf16.msra.mxu0 %v385
        %411 = vmatpush.bf16.msra.mxu0 %v384
        %412 = vmatpush.bf16.msra.mxu0 %v383
        %413 = vmatpush.bf16.msra.mxu0 %v382
        %414 = vmatpush.bf16.msra.mxu0 %v381
        %415 = vmatpush.bf16.msra.mxu0 %v380
        %416 = vmatpush.bf16.msra.mxu0 %v379
        %417 = vmatpush.bf16.msra.mxu0 %v378
        %418 = vmatmul.bf16.gmra.mxu0 %v280
        %v419 = vpop.f32.mrf.mxu0
        %v420 = vadd.f32 0.0, %v419
        %v421 = vpop.f32.mrf.mxu0
        %422 = vdwg.mxu0
        %423 = vmatpush.bf16.msra.mxu0 %v393
        %424 = vmatpush.bf16.msra.mxu0 %v392
        %425 = vmatpush.bf16.msra.mxu0 %v391
        %426 = vmatpush.bf16.msra.mxu0 %v390
        %427 = vmatpush.bf16.msra.mxu0 %v389
        %428 = vmatpush.bf16.msra.mxu0 %v388
        %429 = vmatpush.bf16.msra.mxu0 %v387
        %430 = vmatpush.bf16.msra.mxu0 %v386
        %431 = vmatmul.bf16.gmra.mxu0 %v281
        %v432 = vpop.f32.mrf.mxu0
        %v433 = vadd.f32 %v420, %v432
        %v434 = vpop.f32.mrf.mxu0
        %435 = vdwg.mxu0
        %v436 = vrot.slane %v433, 4
        %v437 = vadd.f32 %v433, %v436
        %v438 = vrot.slane %v437, 2
        %v439 = vadd.f32 %v437, %v438
        %v440 = vrot.slane %v439, 1
        %v441 = vadd.f32 %v439, %v440
        %v442 = vrcp.pop 8.0
        %v443 = vmul.f32 8.0, %v442
        %v444 = vsub.f32 1.0, %v443
        %v445 = vmul.f32 %v442, %v444
        %v446 = vadd.f32 %v442, %v445
        %vm447 = vweird.f32 %v442
        %v448 = vsel %vm447, %v442, %v446
        %v449 = vmul.f32 %v441, %v448
        %v450 = vmul.f32 %v433, %v433
        %v451 = vrot.slane %v450, 4
        %v452 = vadd.f32 %v450, %v451
        %v453 = vrot.slane %v452, 2
        %v454 = vadd.f32 %v452, %v453
        %v455 = vrot.slane %v454, 1
        %v456 = vadd.f32 %v454, %v455
        %v457 = vmul.f32 %v456, %v448
        %v458 = vmul.f32 %v449, %v449
        %v459 = vsub.f32 %v457, %v458
        %v460 = vmax.f32 %v459, 0.0
        %v461 = vld [vmem:[%s242] sm:$0x1]
        %v462 = vadd.f32 %v460, 1e-05
        %v463 = vrsqrt.pop %v462
        %v464 = vmul.f32 %v463, %v462
        %v465 = vmul.f32 %v464, %v463
        %v466 = vmul.f32 0.5, %v465
        %v467 = vsub.f32 1.5, %v466
        %v468 = vmul.f32 %v463, %v467
        %vm469 = vweird.f32 %v462
        %vm470 = vweird.f32 %v463
        %vm471 = vmor %vm469, %vm470
        %v472 = vsel %vm471, %v463, %v468
        %v473 = vmul.f32 %v461, %v472
        %v474 = vld [vmem:[%s277] sm:$0x1]
        %v475 = vmul.f32 %v449, %v473
        %v476 = vsub.f32 %v474, %v475
        %v478 = vperm.slane %v473, 0
        %v480 = vmul.f32 %v433, %v478
        %v482 = vperm.slane %v476, 0
        %v484 = vadd.f32 %v480, %v482
        %v485 = vmax.f32 %v484, 0.0
        %v486 = vpack.c.bf16 %v485, %v485
        %487 = vst [vmem:[%s274] sm:$0xf] %v486
        %s488 = sand.u32 %s129, 1
        %s489 = scalar_lea.sflag [#allocation4], %s488
        %s490 = sand.u32 %s129, 1
        %s491 = smul.addr %s490, 4
        %s492 = scalar_lea.vmem [#allocation8], %s491
        // Predicated region
        $region49: #{tpu_custom_call.1} parent=35 // pred_check
          %p493 = pneg %p139
        $region50: #{tpu_custom_call.1} parent=35 // pred_check_branch
          %495 = sbr.rel (%p493) target = $region52
        $region51: #{tpu_custom_call.1} parent=35 // pred_region
          %497 = vsyncadd %s489, 0
          %s498 = smul.addr %s22, 4
          %s499 = scalar_lea.hbm %s4, %s498
          %s501 = sshll.u32 %s492, 4
          %s502 = int_to_ptr.vmem [resolvable:$true] %s501
          %s503 = sshll.u32 %s499, 4
          %s504 = int_to_ptr.hbm [resolvable:$true] %s503
          %506 = dma.vmem_to_hbm [thread:$0]  %s502, 64, %s504, %s489
        $region52: #{tpu_custom_call.1} parent=35 // pred_fallthru
          _
      $region36: #{tpu_custom_call.1} parent=5 // pred_fallthru
        _
      %p507 = scmp.le.s32.totalorder 2, %s17
      // Predicated region
      $region53: #{tpu_custom_call.1} parent=5 // pred_check
        %p508 = pneg %p507
      $region54: #{tpu_custom_call.1} parent=5 // pred_check_branch
        %510 = sbr.rel (%p508) target = $region56
      $region55: #{tpu_custom_call.1} parent=5 // pred_region
        %s511 = ssub.s32 %s17, 2
        // Predicated region
        $region57: #{tpu_custom_call.1} parent=55 // pred_check
          %p512 = pneg %p145
        $region58: #{tpu_custom_call.1} parent=55 // pred_check_branch
          %514 = sbr.rel (%p512) target = $region60
        $region59: #{tpu_custom_call.1} parent=55 // pred_region
          %s515 = sand.u32 %s130, 1
          %s516 = scalar_lea.sflag [#allocation4], %s515
          %s517 = sand.u32 %s130, 1
          %s518 = smul.addr %s517, 4
          %s519 = scalar_lea.vmem [#allocation8], %s518
          %521 = dma.done %s516, 64
        $region60: #{tpu_custom_call.1} parent=55 // pred_fallthru
          _
      $region56: #{tpu_custom_call.1} parent=5 // pred_fallthru
        _
    $region6: #{tpu_custom_call.1} parent=1 // loop_footer
      %s21 = sadd.s32 1, %s17
    $region7: #{tpu_custom_call.1} parent=1 // loop_footer_branch
      %16 = sbr.rel target = $region3
    $region8: #{tpu_custom_call.1} parent=1 // loop_exit
      _
    %522 = vsyncpa [#allocation3], 1
    %s523 = scalar_lea.sflag [#allocation3], 1
    %524 = vsyncpa %s523, 1
    %525 = vsyncpa [#allocation6], 1
    %s526 = scalar_lea.sflag [#allocation6], 1
    %527 = vsyncpa %s526, 1
    %528 = vsyncpa [#allocation4], 1
    %s529 = scalar_lea.sflag [#allocation4], 1
    %530 = vsyncpa %s529, 1

</llo_original>
